<compile_context>
chip_gen: v7x
topology: tpu7x:2x2x1
jax: 0.10.0
libtpu: 0.0.40
codegen_flags: <defaults>
</compile_context>

<pallas_src>
import jax
import jax.numpy as jnp
from jax import lax
from jax.experimental import pallas as pl
from jax.experimental.pallas import tpu as pltpu


def _round_up(x, m):
    return -(-x // m) * m


# ---------------------------------------------------------------------------
# Kernel factory (closes over static shape parameters)
# ---------------------------------------------------------------------------
def _make_actor_kernel(*, H, A, SLAB, CT, Bp, T_total):
    Tpad = _round_up(T_total, CT)
    needs_mask = Tpad != T_total

    def kernel(x_ref, h0_ref, wih_ref, bih_ref, whh_ref, bhh_ref,
               wout_ref, bout_ref, out_ref, hfin_ref, gi_sc, hist_sc):
        c = pl.program_id(0)

        # Initialize the resident hidden-state carry (output ref doubles as
        # the accumulator; constant index_map keeps it in VMEM across chunks).
        @pl.when(c == 0)
        def _init():
            hfin_ref[...] = h0_ref[...].astype(jnp.float32)

        cd = whh_ref.dtype                       # matmul-input dtype (bf16/f32)
        S = x_ref.shape[-1]

        # ---- Phase A: input projections for the whole chunk, one MXU matmul
        # with M = CT * Bp, hoisted out of the serial recurrence.
        x2d = x_ref[...].reshape(CT * Bp, S).astype(cd)
        gi = jnp.dot(x2d, wih_ref[...], preferred_element_type=jnp.float32)
        gi = gi + bih_ref[...].astype(jnp.float32)           # (CT*Bp, 3H)
        gi_sc[...] = gi.reshape(CT, Bp, 3 * H)

        # Loop-invariant hoists (fori_loop body would otherwise re-emit them).
        whh = whh_ref[...]                                    # (H, 3H) resident
        bhh = jnp.broadcast_to(bhh_ref[...].astype(jnp.float32), (Bp, 3 * H))
        base = c * CT

        # ---- Phase B: serial recurrence, one fused (H, 3H) matmul per step.
        def step(s, h):
            gi_s = gi_sc[s]                                   # (Bp, 3H) f32
            gh = jnp.dot(h.astype(cd), whh,
                         preferred_element_type=jnp.float32) + bhh
            r = jax.nn.sigmoid(gi_s[:, :H] + gh[:, :H])
            z = jax.nn.sigmoid(gi_s[:, H:2 * H] + gh[:, H:2 * H])
            n = jnp.tanh(gi_s[:, 2 * H:] + r * gh[:, 2 * H:])
            h_new = (1.0 - z) * n + z * h
            if needs_mask:                                    # padded T steps
                h_new = jnp.where(base + s < T_total, h_new, h)
            hist_sc[s] = h_new
            return h_new

        h_last = lax.fori_loop(0, CT, step, hfin_ref[...], unroll=True)
        hfin_ref[...] = h_last

        # ---- Phase C: deferred output head + softmax, batched over the chunk.
        h_all = hist_sc[...].reshape(CT * Bp, H)
        logits = jnp.dot(h_all.astype(cd), wout_ref[...],
                         preferred_element_type=jnp.float32)
        logits = logits + bout_ref[...].astype(jnp.float32)   # (CT*Bp, A)
        m = jnp.max(logits, axis=-1, keepdims=True)
        e = jnp.exp(logits - m)
        ssum = jnp.sum(e, axis=-1, keepdims=True)
        inv = pl.reciprocal(ssum, approx=True)
        inv = inv * (2.0 - ssum * inv)                        # Newton refine
        probs = e * inv                                       # (CT*Bp, A)

        # Lane-dense unmasked store: zero-pad to 128 lanes once per chunk.
        padded = jnp.concatenate(
            [probs, jnp.zeros((CT * Bp, SLAB - A), jnp.float32)], axis=-1)
        out_ref[...] = padded.reshape(CT, Bp, SLAB)

    return kernel


# ---------------------------------------------------------------------------
# Wrappers
# ---------------------------------------------------------------------------
def actor_rollout(x_seq, hidden, params, *, chunk_t=8):
    """Run T GRU steps + Linear + softmax inside one pallas_call.

    x_seq : (T, B, state_dim) f32
    hidden: (1, B, hidden_dim) f32
    Returns (probs (T, B, action_dim), final_hidden (1, B, hidden_dim)).
    """
    T, B, S = x_seq.shape
    H = params["w_hh"].shape[0]
    A = params["w_out"].shape[1]
    Bp = _round_up(max(B, 1), 8)                 # pad batch to 8 sublanes
    CT = max(1, min(chunk_t, T))                 # steps per grid iteration
    Tpad = _round_up(T, CT)
    NC = Tpad // CT
    SLAB = _round_up(A, 128)                     # lane-dense probs slab width

    x_p = jnp.zeros((Tpad, Bp, S), jnp.float32).at[:T, :B, :].set(
        x_seq.astype(jnp.float32))
    h_p = jnp.zeros((Bp, H), jnp.float32).at[:B, :].set(
        hidden[0].astype(jnp.float32))

    weights = (params["w_ih"], params["b_ih"], params["w_hh"], params["b_hh"],
               params["w_out"], params["b_out"])

    def const_spec(a):
        nd = a.ndim
        return pl.BlockSpec(a.shape, lambda c, _nd=nd: (0,) * _nd)

    in_specs = (
        [pl.BlockSpec((CT, Bp, S), lambda c: (c, 0, 0)),      # x chunk
         pl.BlockSpec((Bp, H), lambda c: (0, 0))]             # h0 (resident)
        + [const_spec(a) for a in weights])                   # weights resident

    out_specs = (pl.BlockSpec((CT, Bp, SLAB), lambda c: (c, 0, 0)),  # probs
                 pl.BlockSpec((Bp, H), lambda c: (0, 0)))            # final h

    out_shape = (jax.ShapeDtypeStruct((Tpad, Bp, SLAB), jnp.float32),
                 jax.ShapeDtypeStruct((Bp, H), jnp.float32))

    kernel = _make_actor_kernel(H=H, A=A, SLAB=SLAB, CT=CT, Bp=Bp, T_total=T)

    flops = int(Tpad) * int(Bp) * (2 * S * 3 * H + 2 * H * 3 * H + 2 * H * A)
    transcendentals = int(Tpad) * int(Bp) * (3 * H + A)
    param_bytes = sum(int(a.size) * a.dtype.itemsize for a in weights)
    bytes_accessed = int(param_bytes + x_p.size * 4 + h_p.size * 4
                         + Tpad * Bp * SLAB * 4 + Bp * H * 4)

    probs_slab, h_fin = pl.pallas_call(
        kernel,
        out_shape=out_shape,
        grid_spec=pltpu.PrefetchScalarGridSpec(
            num_scalar_prefetch=0,
            grid=(NC,),
            in_specs=in_specs,
            out_specs=out_specs,
            scratch_shapes=[pltpu.VMEM((CT, Bp, 3 * H), jnp.float32),  # gi
                            pltpu.VMEM((CT, Bp, H), jnp.float32)],     # h hist
        ),
        compiler_params=pltpu.CompilerParams(
            dimension_semantics=("arbitrary",)),
        cost_estimate=pl.CostEstimate(
            flops=flops,
            transcendentals=transcendentals,
            bytes_accessed=bytes_accessed),
    )(x_p, h_p, *weights)

    probs = probs_slab[:T, :B, :A]
    return probs, h_fin[:B][None, :, :]


def actor_forward(x, hidden, params):
    """Exact PyTorch Actor.forward semantics: one GRU step + Linear + softmax.

    x: (B, state_dim), hidden: (1, B, hidden_dim).
    Returns (action_probs (1, B, action_dim), new_hidden (1, B, hidden_dim)).
    """
    probs, new_hidden = actor_rollout(x[None, :, :], hidden, params)
    return probs, new_hidden


# ---------------------------------------------------------------------------
# Parameters (PyTorch layout -> kernel layout)
# ---------------------------------------------------------------------------
def init_actor_params_torch_layout(key, state_dim, hidden_dim, action_dim):
    """Synthetic params in PyTorch nn.GRU / nn.Linear layout (gate order r,z,n)."""
    k = jax.random.split(key, 6)
    scale = 0.1
    return dict(
        weight_ih_l0=scale * jax.random.normal(k[0], (3 * hidden_dim, state_dim), jnp.float32),
        weight_hh_l0=scale * jax.random.normal(k[1], (3 * hidden_dim, hidden_dim), jnp.float32),
        bias_ih_l0=scale * jax.random.normal(k[2], (3 * hidden_dim,), jnp.float32),
        bias_hh_l0=scale * jax.random.normal(k[3], (3 * hidden_dim,), jnp.float32),
        out_weight=scale * jax.random.normal(k[4], (action_dim, hidden_dim), jnp.float32),
        out_bias=scale * jax.random.normal(k[5], (action_dim,), jnp.float32),
    )


def prepare_actor_params(tp, matmul_dtype=jnp.bfloat16):
    """PyTorch-layout params -> kernel layout: fused transposed (., 3H) gate
    matrices and fused biases.  Matmul inputs default to bf16 (f32 MXU
    accumulation); gate/softmax math stays f32.  Pass jnp.float32 for strict
    f32-matching (e.g. very long rollouts)."""
    return dict(
        w_ih=tp["weight_ih_l0"].T.astype(matmul_dtype),       # (S, 3H)
        b_ih=tp["bias_ih_l0"][None, :].astype(jnp.float32),   # (1, 3H)
        w_hh=tp["weight_hh_l0"].T.astype(matmul_dtype),       # (H, 3H)
        b_hh=tp["bias_hh_l0"][None, :].astype(jnp.float32),   # (1, 3H)
        w_out=tp["out_weight"].T.astype(matmul_dtype),        # (H, A)
        b_out=tp["out_bias"][None, :].astype(jnp.float32),    # (1, A)
    )


# ---------------------------------------------------------------------------
# Pure-JAX reference (mirrors torch.nn.GRU(seq) + Linear + softmax)
# ---------------------------------------------------------------------------
def actor_reference(x_seq, hidden, tp):
    H = tp["weight_hh_l0"].shape[1]
    hp = jax.lax.Precision.HIGHEST
    h = hidden[0]
    probs = []
    for t in range(x_seq.shape[0]):
        gi = jnp.dot(x_seq[t], tp["weight_ih_l0"].T, precision=hp) + tp["bias_ih_l0"]
        gh = jnp.dot(h, tp["weight_hh_l0"].T, precision=hp) + tp["bias_hh_l0"]
        r = jax.nn.sigmoid(gi[:, :H] + gh[:, :H])
        z = jax.nn.sigmoid(gi[:, H:2 * H] + gh[:, H:2 * H])
        n = jnp.tanh(gi[:, 2 * H:] + r * gh[:, 2 * H:])
        h = (1.0 - z) * n + z * h
        logits = jnp.dot(h, tp["out_weight"].T, precision=hp) + tp["out_bias"]
        probs.append(jax.nn.softmax(logits, axis=-1))
    return jnp.stack(probs), h[None]


# ---------------------------------------------------------------------------
if __name__ == "__main__":
    state_dim, hidden_dim, action_dim = 8, 32, 16
    batch, seq = 4, 6

    key = jax.random.PRNGKey(0)
    kp, kx, kh, kxs = jax.random.split(key, 4)

    torch_params = init_actor_params_torch_layout(kp, state_dim, hidden_dim, action_dim)
    params_f32 = prepare_actor_params(torch_params, matmul_dtype=jnp.float32)
    params_bf16 = prepare_actor_params(torch_params)          # bf16 default

    x = jax.random.normal(kx, (batch, state_dim), jnp.float32)
    hidden = jax.random.normal(kh, (1, batch, hidden_dim), jnp.float32)
    x_seq = jax.random.normal(kxs, (seq, batch, state_dim), jnp.float32)

    # --- single step: exact Actor.forward semantics (f32 matmul inputs) -----
    probs, new_hidden = actor_forward(x, hidden, params_f32)
    jax.block_until_ready((probs, new_hidden))

    assert probs.shape == (1, batch, action_dim)
    assert new_hidden.shape == (1, batch, hidden_dim)
    assert jnp.allclose(jnp.sum(probs, axis=-1), 1.0, atol=1e-5)

    ref_probs, ref_hidden = actor_reference(x[None], hidden, torch_params)
    assert jnp.allclose(probs, ref_probs, atol=1e-3)
    assert jnp.allclose(new_hidden, ref_hidden, atol=1e-3)

    # --- multi-step rollout, chunked (chunk_t=4 exercises T-padding/masking) -
    probs_seq, h_fin = actor_rollout(x_seq, hidden, params_f32, chunk_t=4)
    jax.block_until_ready((probs_seq, h_fin))

    assert probs_seq.shape == (seq, batch, action_dim)
    assert h_fin.shape == (1, batch, hidden_dim)
    assert jnp.allclose(jnp.sum(probs_seq, axis=-1), 1.0, atol=1e-5)

    ref_probs_seq, ref_h_fin = actor_reference(x_seq, hidden, torch_params)
    assert jnp.allclose(probs_seq, ref_probs_seq, atol=1e-3)
    assert jnp.allclose(h_fin, ref_h_fin, atol=1e-3)

    # --- bf16 matmul inputs (default): looser tolerance (error compounds
    # slightly over the rollout; accumulation stays f32) ----------------------
    probs_bf, h_bf = actor_rollout(x_seq, hidden, params_bf16)
    jax.block_until_ready((probs_bf, h_bf))
    assert jnp.allclose(jnp.sum(probs_bf, axis=-1), 1.0, atol=1e-5)
    assert jnp.allclose(probs_bf, ref_probs_seq, atol=1e-2)
    assert jnp.allclose(h_bf, ref_h_fin, atol=5e-2)

    print("KERNEL_OK")
</pallas_src>

<mosaic_0001>
module attributes {stable_mosaic.version = 11 : i64} {
  func.func @kernel(%arg0: i32, %arg1: memref<1x8x8xf32, #tpu.memory_space<vmem>>, %arg2: memref<8x32xf32, #tpu.memory_space<vmem>>, %arg3: memref<8x96xf32, #tpu.memory_space<vmem>>, %arg4: memref<1x96xf32, #tpu.memory_space<vmem>>, %arg5: memref<32x96xf32, #tpu.memory_space<vmem>>, %arg6: memref<1x96xf32, #tpu.memory_space<vmem>>, %arg7: memref<32x16xf32, #tpu.memory_space<vmem>>, %arg8: memref<1x16xf32, #tpu.memory_space<vmem>>, %arg9: memref<1x8x128xf32, #tpu.memory_space<vmem>>, %arg10: memref<8x32xf32, #tpu.memory_space<vmem>>, %arg11: memref<1x8x96xf32, #tpu.memory_space<vmem>>, %arg12: memref<1x8x32xf32, #tpu.memory_space<vmem>>) attributes {dimension_semantics = [#tpu.dimension_semantics<arbitrary>], iteration_bounds = array<i64: 1>, scalar_prefetch = 0 : i64, scratch_operands = 2 : i64, tpu.core_type = #tpu.core_type<tc>, window_params = [{transform_indices = @transform_0, window_bounds = array<i64: 1, 8, 8>}, {pipeline_mode = #tpu.pipeline_mode<synchronous>, transform_indices = @transform_1, window_bounds = array<i64: 8, 32>}, {pipeline_mode = #tpu.pipeline_mode<synchronous>, transform_indices = @transform_2, window_bounds = array<i64: 8, 96>}, {pipeline_mode = #tpu.pipeline_mode<synchronous>, transform_indices = @transform_3, window_bounds = array<i64: 1, 96>}, {pipeline_mode = #tpu.pipeline_mode<synchronous>, transform_indices = @transform_4, window_bounds = array<i64: 32, 96>}, {pipeline_mode = #tpu.pipeline_mode<synchronous>, transform_indices = @transform_5, window_bounds = array<i64: 1, 96>}, {pipeline_mode = #tpu.pipeline_mode<synchronous>, transform_indices = @transform_6, window_bounds = array<i64: 32, 16>}, {pipeline_mode = #tpu.pipeline_mode<synchronous>, transform_indices = @transform_7, window_bounds = array<i64: 1, 16>}, {transform_indices = @transform_8, window_bounds = array<i64: 1, 8, 128>}, {pipeline_mode = #tpu.pipeline_mode<synchronous>, transform_indices = @transform_9, window_bounds = array<i64: 8, 32>}]} {
    %c0_i32 = arith.constant 0 : i32
    %0 = arith.cmpi eq, %arg0, %c0_i32 : i32
    %1 = arith.extui %0 : i1 to i32
    %c0_i32_0 = arith.constant 0 : i32
    %2 = arith.cmpi ne, %1, %c0_i32_0 : i32
    scf.if %2 {
      %c0_42 = arith.constant 0 : index
      %c0_43 = arith.constant 0 : index
      %78 = vector.load %arg2[%c0_42, %c0_43] : memref<8x32xf32, #tpu.memory_space<vmem>>, vector<8x32xf32>
      %c0_44 = arith.constant 0 : index
      %c0_45 = arith.constant 0 : index
      %79 = vector.load %arg10[%c0_44, %c0_45] : memref<8x32xf32, #tpu.memory_space<vmem>>, vector<8x32xf32>
      tpu.vector_store %arg10[%c0_44, %c0_45], %78 {strides = array<i32>} : memref<8x32xf32, #tpu.memory_space<vmem>>, vector<8x32xf32>,
    } else {
    }
    %c0 = arith.constant 0 : index
    %c0_1 = arith.constant 0 : index
    %c0_2 = arith.constant 0 : index
    %3 = vector.load %arg1[%c0, %c0_1, %c0_2] : memref<1x8x8xf32, #tpu.memory_space<vmem>>, vector<1x8x8xf32>
    %4 = vector.shape_cast %3 : vector<1x8x8xf32> to vector<8x8xf32>
    %c0_3 = arith.constant 0 : index
    %c0_4 = arith.constant 0 : index
    %5 = vector.load %arg3[%c0_3, %c0_4] : memref<8x96xf32, #tpu.memory_space<vmem>>, vector<8x96xf32>
    %cst = arith.constant dense<0.000000e+00> : vector<8x96xf32>
    %6 = tpu.matmul %4, %5, %cst {dimension_numbers = #tpu.dot_dimension_numbers<[1], [0], [0], [1], [0, 0, 1, 1], [], []>} : vector<8x8xf32>, vector<8x96xf32>, vector<8x96xf32> -> vector<8x96xf32>
    %c0_5 = arith.constant 0 : index
    %c0_6 = arith.constant 0 : index
    %7 = vector.load %arg4[%c0_5, %c0_6] : memref<1x96xf32, #tpu.memory_space<vmem>>, vector<1x96xf32>
    %8 = vector.broadcast %7 : vector<1x96xf32> to vector<8x96xf32>
    %9 = arith.addf %6, %8 : vector<8x96xf32>
    %10 = vector.shape_cast %9 : vector<8x96xf32> to vector<1x8x96xf32>
    %c0_7 = arith.constant 0 : index
    %c0_8 = arith.constant 0 : index
    %c0_9 = arith.constant 0 : index
    %11 = vector.load %arg11[%c0_7, %c0_8, %c0_9] : memref<1x8x96xf32, #tpu.memory_space<vmem>>, vector<1x8x96xf32>
    tpu.vector_store %arg11[%c0_7, %c0_8, %c0_9], %10 {strides = array<i32>} : memref<1x8x96xf32, #tpu.memory_space<vmem>>, vector<1x8x96xf32>,
    %c0_10 = arith.constant 0 : index
    %c0_11 = arith.constant 0 : index
    %12 = vector.load %arg5[%c0_10, %c0_11] : memref<32x96xf32, #tpu.memory_space<vmem>>, vector<32x96xf32>
    %c0_12 = arith.constant 0 : index
    %c0_13 = arith.constant 0 : index
    %13 = vector.load %arg6[%c0_12, %c0_13] : memref<1x96xf32, #tpu.memory_space<vmem>>, vector<1x96xf32>
    %14 = vector.shape_cast %13 : vector<1x96xf32> to vector<1x96xf32>
    %15 = vector.broadcast %14 : vector<1x96xf32> to vector<8x96xf32>
    %c0_14 = arith.constant 0 : index
    %c0_15 = arith.constant 0 : index
    %16 = vector.load %arg10[%c0_14, %c0_15] : memref<8x32xf32, #tpu.memory_space<vmem>>, vector<8x32xf32>
    %c0_i32_16 = arith.constant 0 : i32
    %17 = arith.index_cast %c0_i32_16 : i32 to index
    %c0_17 = arith.constant 0 : index
    %c0_18 = arith.constant 0 : index
    %18 = vector.load %arg11[%17, %c0_17, %c0_18] : memref<1x8x96xf32, #tpu.memory_space<vmem>>, vector<1x8x96xf32>
    %19 = vector.shape_cast %18 : vector<1x8x96xf32> to vector<8x96xf32>
    %cst_19 = arith.constant dense<0.000000e+00> : vector<8x96xf32>
    %20 = tpu.matmul %16, %12, %cst_19 {dimension_numbers = #tpu.dot_dimension_numbers<[1], [0], [0], [1], [0, 0, 1, 1], [], []>} : vector<8x32xf32>, vector<32x96xf32>, vector<8x96xf32> -> vector<8x96xf32>
    %21 = arith.addf %20, %15 : vector<8x96xf32>
    %22 = vector.extract_strided_slice %19 {offsets = [0, 0], sizes = [8, 32], strides = [1, 1]} : vector<8x96xf32> to vector<8x32xf32>
    %23 = vector.extract_strided_slice %21 {offsets = [0, 0], sizes = [8, 32], strides = [1, 1]} : vector<8x96xf32> to vector<8x32xf32>
    %24 = arith.addf %22, %23 : vector<8x32xf32>
    %25 = arith.negf %24 : vector<8x32xf32>
    %26 = math.exp %25 : vector<8x32xf32>
    %cst_20 = arith.constant 1.000000e+00 : f32
    %27 = vector.broadcast %cst_20 : f32 to vector<8x32xf32>
    %28 = arith.addf %27, %26 : vector<8x32xf32>
    %29 = arith.divf %27, %28 : vector<8x32xf32>
    %30 = vector.extract_strided_slice %19 {offsets = [0, 32], sizes = [8, 32], strides = [1, 1]} : vector<8x96xf32> to vector<8x32xf32>
    %31 = vector.extract_strided_slice %21 {offsets = [0, 32], sizes = [8, 32], strides = [1, 1]} : vector<8x96xf32> to vector<8x32xf32>
    %32 = arith.addf %30, %31 : vector<8x32xf32>
    %33 = arith.negf %32 : vector<8x32xf32>
    %34 = math.exp %33 : vector<8x32xf32>
    %cst_21 = arith.constant 1.000000e+00 : f32
    %35 = vector.broadcast %cst_21 : f32 to vector<8x32xf32>
    %36 = arith.addf %35, %34 : vector<8x32xf32>
    %37 = arith.divf %35, %36 : vector<8x32xf32>
    %38 = vector.extract_strided_slice %19 {offsets = [0, 64], sizes = [8, 32], strides = [1, 1]} : vector<8x96xf32> to vector<8x32xf32>
    %39 = vector.extract_strided_slice %21 {offsets = [0, 64], sizes = [8, 32], strides = [1, 1]} : vector<8x96xf32> to vector<8x32xf32>
    %40 = arith.mulf %29, %39 : vector<8x32xf32>
    %41 = arith.addf %38, %40 : vector<8x32xf32>
    %42 = math.tanh %41 : vector<8x32xf32>
    %cst_22 = arith.constant 1.000000e+00 : f32
    %43 = vector.broadcast %cst_22 : f32 to vector<8x32xf32>
    %44 = arith.subf %43, %37 : vector<8x32xf32>
    %45 = arith.mulf %44, %42 : vector<8x32xf32>
    %46 = arith.mulf %37, %16 : vector<8x32xf32>
    %47 = arith.addf %45, %46 : vector<8x32xf32>
    %48 = arith.index_cast %c0_i32_16 : i32 to index
    %c0_23 = arith.constant 0 : index
    %c0_24 = arith.constant 0 : index
    %49 = vector.load %arg12[%48, %c0_23, %c0_24] : memref<1x8x32xf32, #tpu.memory_space<vmem>>, vector<1x8x32xf32>
    %50 = vector.shape_cast %49 : vector<1x8x32xf32> to vector<8x32xf32>
    %51 = vector.shape_cast %47 : vector<8x32xf32> to vector<1x8x32xf32>
    tpu.vector_store %arg12[%48, %c0_23, %c0_24], %51 {strides = array<i32>} : memref<1x8x32xf32, #tpu.memory_space<vmem>>, vector<1x8x32xf32>,
    %c1_i32 = arith.constant 1 : i32
    %c0_25 = arith.constant 0 : index
    %c0_26 = arith.constant 0 : index
    %52 = vector.load %arg10[%c0_25, %c0_26] : memref<8x32xf32, #tpu.memory_space<vmem>>, vector<8x32xf32>
    tpu.vector_store %arg10[%c0_25, %c0_26], %47 {strides = array<i32>} : memref<8x32xf32, #tpu.memory_space<vmem>>, vector<8x32xf32>,
    %c0_27 = arith.constant 0 : index
    %c0_28 = arith.constant 0 : index
    %c0_29 = arith.constant 0 : index
    %53 = vector.load %arg12[%c0_27, %c0_28, %c0_29] : memref<1x8x32xf32, #tpu.memory_space<vmem>>, vector<1x8x32xf32>
    %54 = vector.shape_cast %53 : vector<1x8x32xf32> to vector<8x32xf32>
    %c0_30 = arith.constant 0 : index
    %c0_31 = arith.constant 0 : index
    %55 = vector.load %arg7[%c0_30, %c0_31] : memref<32x16xf32, #tpu.memory_space<vmem>>, vector<32x16xf32>
    %cst_32 = arith.constant dense<0.000000e+00> : vector<8x16xf32>
    %56 = tpu.matmul %54, %55, %cst_32 {dimension_numbers = #tpu.dot_dimension_numbers<[1], [0], [0], [1], [0, 0, 1, 1], [], []>} : vector<8x32xf32>, vector<32x16xf32>, vector<8x16xf32> -> vector<8x16xf32>
    %c0_33 = arith.constant 0 : index
    %c0_34 = arith.constant 0 : index
    %57 = vector.load %arg8[%c0_33, %c0_34] : memref<1x16xf32, #tpu.memory_space<vmem>>, vector<1x16xf32>
    %58 = vector.broadcast %57 : vector<1x16xf32> to vector<8x16xf32>
    %59 = arith.addf %56, %58 : vector<8x16xf32>
    %cst_35 = arith.constant dense<0xFF800000> : vector<8xf32>
    %60 = vector.multi_reduction <maximumf>, %59, %cst_35 [1] : vector<8x16xf32> to vector<8xf32>
    %61 = vector.shape_cast %60 : vector<8xf32> to vector<8x1xf32>
    %62 = vector.broadcast %61 : vector<8x1xf32> to vector<8x16xf32>
    %63 = arith.subf %59, %62 : vector<8x16xf32>
    %64 = math.exp %63 : vector<8x16xf32>
    %cst_36 = arith.constant dense<0.000000e+00> : vector<8xf32>
    %65 = vector.multi_reduction <add>, %64, %cst_36 [1] : vector<8x16xf32> to vector<8xf32>
    %66 = vector.shape_cast %65 : vector<8xf32> to vector<8x1xf32>
    %67 = tpu.reciprocal %66 {approx = true} : vector<8x1xf32> -> vector<8x1xf32>
    %68 = arith.mulf %66, %67 : vector<8x1xf32>
    %cst_37 = arith.constant 2.000000e+00 : f32
    %69 = vector.broadcast %cst_37 : f32 to vector<8x1xf32>
    %70 = arith.subf %69, %68 : vector<8x1xf32>
    %71 = arith.mulf %67, %70 : vector<8x1xf32>
    %72 = vector.broadcast %71 : vector<8x1xf32> to vector<8x16xf32>
    %73 = arith.mulf %64, %72 : vector<8x16xf32>
    %cst_38 = arith.constant 0.000000e+00 : f32
    %74 = vector.broadcast %cst_38 : f32 to vector<8x112xf32>
    %75 = tpu.concatenate %73, %74 in 1 : vector<8x16xf32>, vector<8x112xf32> -> vector<8x128xf32>
    %76 = vector.shape_cast %75 : vector<8x128xf32> to vector<1x8x128xf32>
    %c0_39 = arith.constant 0 : index
    %c0_40 = arith.constant 0 : index
    %c0_41 = arith.constant 0 : index
    %77 = vector.load %arg9[%c0_39, %c0_40, %c0_41] : memref<1x8x128xf32, #tpu.memory_space<vmem>>, vector<1x8x128xf32>
    tpu.vector_store %arg9[%c0_39, %c0_40, %c0_41], %76 {strides = array<i32>} : memref<1x8x128xf32, #tpu.memory_space<vmem>>, vector<1x8x128xf32>,
    return
  }
  func.func @transform_0(%arg0: i32) -> (i32, i32, i32) {
    %c0_i32 = arith.constant 0 : i32
    %c0_i32_0 = arith.constant 0 : i32
    %c0_i32_1 = arith.constant 0 : i32
    return %arg0, %c0_i32, %c0_i32_0 : i32, i32, i32
  }
  func.func @transform_1(%arg0: i32) -> (i32, i32) {
    %c0_i32 = arith.constant 0 : i32
    %c0_i32_0 = arith.constant 0 : i32
    %c0_i32_1 = arith.constant 0 : i32
    return %c0_i32, %c0_i32_0 : i32, i32
  }
  func.func @transform_2(%arg0: i32) -> (i32, i32) {
    %c0_i32 = arith.constant 0 : i32
    %c0_i32_0 = arith.constant 0 : i32
    %c0_i32_1 = arith.constant 0 : i32
    return %c0_i32, %c0_i32_0 : i32, i32
  }
  func.func @transform_3(%arg0: i32) -> (i32, i32) {
    %c0_i32 = arith.constant 0 : i32
    %c0_i32_0 = arith.constant 0 : i32
    %c0_i32_1 = arith.constant 0 : i32
    return %c0_i32, %c0_i32_0 : i32, i32
  }
  func.func @transform_4(%arg0: i32) -> (i32, i32) {
    %c0_i32 = arith.constant 0 : i32
    %c0_i32_0 = arith.constant 0 : i32
    %c0_i32_1 = arith.constant 0 : i32
    return %c0_i32, %c0_i32_0 : i32, i32
  }
  func.func @transform_5(%arg0: i32) -> (i32, i32) {
    %c0_i32 = arith.constant 0 : i32
    %c0_i32_0 = arith.constant 0 : i32
    %c0_i32_1 = arith.constant 0 : i32
    return %c0_i32, %c0_i32_0 : i32, i32
  }
  func.func @transform_6(%arg0: i32) -> (i32, i32) {
    %c0_i32 = arith.constant 0 : i32
    %c0_i32_0 = arith.constant 0 : i32
    %c0_i32_1 = arith.constant 0 : i32
    return %c0_i32, %c0_i32_0 : i32, i32
  }
  func.func @transform_7(%arg0: i32) -> (i32, i32) {
    %c0_i32 = arith.constant 0 : i32
    %c0_i32_0 = arith.constant 0 : i32
    %c0_i32_1 = arith.constant 0 : i32
    return %c0_i32, %c0_i32_0 : i32, i32
  }
  func.func @transform_8(%arg0: i32) -> (i32, i32, i32) {
    %c0_i32 = arith.constant 0 : i32
    %c0_i32_0 = arith.constant 0 : i32
    %c0_i32_1 = arith.constant 0 : i32
    return %arg0, %c0_i32, %c0_i32_0 : i32, i32, i32
  }
  func.func @transform_9(%arg0: i32) -> (i32, i32) {
    %c0_i32 = arith.constant 0 : i32
    %c0_i32_0 = arith.constant 0 : i32
    %c0_i32_1 = arith.constant 0 : i32
    return %c0_i32, %c0_i32_0 : i32, i32
  }
}

</mosaic_0001>

<llo_original>
// kernel: tpu_custom_call.1
$region0: #{tpu_custom_call.1}
  #allocation0 [shape = 'u32[]', space=smem, size = 0x4, offset = 0x4, fixed_abs, tag = 'smem constant byte address 0x4 - core index']
  #allocation1 [shape = 'u32[144,128]{1,0:T(1,128)}', space=vmem, size = 0x12000, scoped, tag = 'internal scratch']
  #allocation2 [shape = 'f32[1,8,96]{2,1,0:T(8,128)}', space=vmem, size = 0x1000, scoped, tag = 'scratch operand']
  #allocation3 [shape = 'f32[1,8,32]{2,1,0:T(8,128)}', space=vmem, size = 0x1000, scoped, tag = 'scratch operand']
  %s0 = inlined_call_operand.vmem [shape: f32[1,8,8], index: 0, kind: input, shape index: {}]
  %s1 = inlined_call_operand.vmem [shape: f32[8,32], index: 1, kind: input, shape index: {}]
  %s2 = inlined_call_operand.hbm [shape: f32[8,96], index: 2, kind: input, shape index: {}]
  %s3 = inlined_call_operand.vmem [shape: f32[1,96], index: 3, kind: input, shape index: {}]
  %s4 = inlined_call_operand.vmem [shape: f32[32,96], index: 4, kind: input, shape index: {}]
  %s5 = inlined_call_operand.vmem [shape: f32[1,96], index: 5, kind: input, shape index: {}]
  %s6 = inlined_call_operand.vmem [shape: f32[32,16], index: 6, kind: input, shape index: {}]
  %s7 = inlined_call_operand.vmem [shape: f32[1,16], index: 7, kind: input, shape index: {}]
  %s8 = inlined_call_operand.hbm [shape: f32[1,8,128], index: 8, kind: output, shape index: {0}]
  %s9 = inlined_call_operand.hbm [shape: f32[8,32], index: 9, kind: output, shape index: {1}]
  %10 = xla_tuple %s8, %s9
  %s11 = sld [smem:[#allocation0]]
  $region58: #{tpu_custom_call.1} parent=0
    _
  %s13 = ssub.s32 1, %s11
  %s14 = scalar_select 0, %s13, %s11
  $region1: #{tpu_custom_call.1} parent=0
    #allocation4 [shape = 'u8[4096]{0}', space=vmem, size = 0x1000, scoped, tag = 'input window, operand 2, single buffered']
    #allocation5 [shape = 's32[1]{0}', space=sflag, size = 0x4, scoped, tag = 'scoped memory for tpu_custom_call.1']
    #allocation6 [shape = 's32[1]{0}', space=sflag, size = 0x4, scoped, tag = 'scoped memory for tpu_custom_call.1']
    #allocation7 [shape = 'u8[4096]{0}', space=vmem, size = 0x1000, scoped, tag = 'output window, operand 0, single buffered']
    #allocation8 [shape = 'u8[4096]{0}', space=vmem, size = 0x1000, scoped, tag = 'output window, operand 1, single buffered']
    #allocation9 [shape = 's32[1]{0}', space=sflag, size = 0x4, scoped, tag = 'scoped memory for tpu_custom_call.1']
    %15 = vsyncpa [#allocation5], 0
    %16 = vsyncpa [#allocation6], 0
    %17 = vsyncpa [#allocation9], 0
    // Predicated region
    $region2: #{tpu_custom_call.1} parent=1 // pred_check
      _
    $region3: #{tpu_custom_call.1} parent=1 // pred_check_branch
      %19 = sbr.rel (0) target = $region5
    $region4: #{tpu_custom_call.1} parent=1 // pred_region
      _
    $region5: #{tpu_custom_call.1} parent=1 // pred_fallthru
      _
    // Predicated region
    $region6: #{tpu_custom_call.1} parent=1 // pred_check
      _
    $region7: #{tpu_custom_call.1} parent=1 // pred_check_branch
      %21 = sbr.rel (0) target = $region9
    $region8: #{tpu_custom_call.1} parent=1 // pred_region
      _
    $region9: #{tpu_custom_call.1} parent=1 // pred_fallthru
      _
    // Predicated region
    $region10: #{tpu_custom_call.1} parent=1 // pred_check
      _
    $region11: #{tpu_custom_call.1} parent=1 // pred_check_branch
      %23 = sbr.rel (0) target = $region13
    $region12: #{tpu_custom_call.1} parent=1 // pred_region
      %s25 = ssub.s32 128, 128
      %26 = vsyncadd [#allocation5], %s25
      %s28 = sshll.u32 [#allocation4], 4
      %s29 = int_to_ptr.vmem [resolvable:$true] %s28
      %31 = dma.hbm_to_vmem [thread:$0]  %s2, 128, %s29, [#allocation5]
    $region13: #{tpu_custom_call.1} parent=1 // pred_fallthru
      _
    // Predicated region
    $region14: #{tpu_custom_call.1} parent=1 // pred_check
      _
    $region15: #{tpu_custom_call.1} parent=1 // pred_check_branch
      %33 = sbr.rel (0) target = $region17
    $region16: #{tpu_custom_call.1} parent=1 // pred_region
      _
    $region17: #{tpu_custom_call.1} parent=1 // pred_fallthru
      _
    // Predicated region
    $region18: #{tpu_custom_call.1} parent=1 // pred_check
      _
    $region19: #{tpu_custom_call.1} parent=1 // pred_check_branch
      %35 = sbr.rel (0) target = $region21
    $region20: #{tpu_custom_call.1} parent=1 // pred_region
      _
    $region21: #{tpu_custom_call.1} parent=1 // pred_fallthru
      _
    // Predicated region
    $region22: #{tpu_custom_call.1} parent=1 // pred_check
      _
    $region23: #{tpu_custom_call.1} parent=1 // pred_check_branch
      %37 = sbr.rel (0) target = $region25
    $region24: #{tpu_custom_call.1} parent=1 // pred_region
      _
    $region25: #{tpu_custom_call.1} parent=1 // pred_fallthru
      _
    // Predicated region
    $region26: #{tpu_custom_call.1} parent=1 // pred_check
      _
    $region27: #{tpu_custom_call.1} parent=1 // pred_check_branch
      %39 = sbr.rel (0) target = $region29
    $region28: #{tpu_custom_call.1} parent=1 // pred_region
      _
    $region29: #{tpu_custom_call.1} parent=1 // pred_fallthru
      _
    // Predicated region
    $region30: #{tpu_custom_call.1} parent=1 // pred_check
      _
    $region31: #{tpu_custom_call.1} parent=1 // pred_check_branch
      %41 = sbr.rel (0) target = $region33
    $region32: #{tpu_custom_call.1} parent=1 // pred_region
      _
    $region33: #{tpu_custom_call.1} parent=1 // pred_fallthru
      _
    // Predicated region
    $region34: #{tpu_custom_call.1} parent=1 // pred_check
      _
    $region35: #{tpu_custom_call.1} parent=1 // pred_check_branch
      %43 = sbr.rel (0) target = $region37
    $region36: #{tpu_custom_call.1} parent=1 // pred_region
      %44 = dma.done [#allocation5], 128
    $region37: #{tpu_custom_call.1} parent=1 // pred_fallthru
      _
    %p45 = scmp.eq.s32.totalorder 0, 0
    // Predicated region
    $region38: #{tpu_custom_call.1} parent=1 // pred_check
      %p46 = pneg %p45
    $region39: #{tpu_custom_call.1} parent=1 // pred_check_branch
      %48 = sbr.rel (%p46) target = $region41
    $region40: #{tpu_custom_call.1} parent=1 // pred_region
      %v49 = vld [vmem:[%s1] sm:$0xff]
      %vm50 = vcmask 261120
      %51 = vst.msk [vmem:[#allocation8] sm:$0xff] %vm50, %v49
    $region41: #{tpu_custom_call.1} parent=1 // pred_fallthru
      _
    %v52 = vld [vmem:[%s0] sm:$0xff]
    %v53 = vld [vmem:[#allocation4] sm:$0xff]
    %v54 = vld [vmem:[%s3] sm:$0x1]
    %v56 = vlaneseq
    %v57 = vshrl.u32 %v56, 7
    %v58 = vsub.s32 0, %v57
    %v59 = vrot.slane %v54, %v58
    %vm61 = vcmask 64512
    %v63 = vsel %vm61, %v52, 0
    %65 = vmatprep.subr.mxu0 0.0
    %66 = vmatpush1.msra.mxu0 %v53
    %67 = vmatprep.subr.mxu0 0.0
    %68 = vmatpush1.msra.mxu0 0.0
    %69 = vmatprep.subr.mxu0 0.0
    %70 = vmatpush1.msra.mxu0 0.0
    %71 = vmatprep.subr.mxu0 0.0
    %72 = vmatpush1.msra.mxu0 0.0
    %73 = vmatprep.subr.mxu0 0.0
    %74 = vmatpush1.msra.mxu0 0.0
    %75 = vmatprep.subr.mxu0 0.0
    %76 = vmatpush1.msra.mxu0 0.0
    %77 = vmatprep.subr.mxu0 0.0
    %78 = vmatpush1.msra.mxu0 0.0
    %79 = vmatprep.subr.mxu0 0.0
    %80 = vmatpush1.msra.mxu0 0.0
    %81 = vmatprep.subr.mxu0 0.0
    %82 = vmatpush1.msra.mxu0 0.0
    %83 = vmatprep.subr.mxu0 0.0
    %84 = vmatpush1.msra.mxu0 0.0
    %85 = vmatprep.subr.mxu0 0.0
    %86 = vmatpush1.msra.mxu0 0.0
    %87 = vmatprep.subr.mxu0 0.0
    %88 = vmatpush1.msra.mxu0 0.0
    %89 = vmatprep.subr.mxu0 0.0
    %90 = vmatpush1.msra.mxu0 0.0
    %91 = vmatprep.subr.mxu0 0.0
    %92 = vmatpush1.msra.mxu0 0.0
    %93 = vmatprep.subr.mxu0 0.0
    %94 = vmatpush1.msra.mxu0 0.0
    %95 = vmatprep.subr.mxu0 0.0
    %96 = vmatpush1.msra.mxu0 0.0
    %97 = vmatprep.subr.mxu0 0.0
    %98 = vmatpush1.msra.mxu0 0.0
    %99 = vmatprep.subr.mxu0 0.0
    %100 = vmatpush1.msra.mxu0 0.0
    %101 = vmatprep.subr.mxu0 0.0
    %102 = vmatpush1.msra.mxu0 0.0
    %103 = vmatprep.subr.mxu0 0.0
    %104 = vmatpush1.msra.mxu0 0.0
    %105 = vmatprep.subr.mxu0 0.0
    %106 = vmatpush1.msra.mxu0 0.0
    %107 = vmatprep.subr.mxu0 0.0
    %108 = vmatpush1.msra.mxu0 0.0
    %109 = vmatprep.subr.mxu0 0.0
    %110 = vmatpush1.msra.mxu0 0.0
    %111 = vmatprep.subr.mxu0 0.0
    %112 = vmatpush1.msra.mxu0 0.0
    %113 = vmatprep.subr.mxu0 0.0
    %114 = vmatpush1.msra.mxu0 0.0
    %115 = vmatprep.subr.mxu0 0.0
    %116 = vmatpush1.msra.mxu0 0.0
    %117 = vmatprep.subr.mxu0 0.0
    %118 = vmatpush1.msra.mxu0 0.0
    %119 = vmatprep.subr.mxu0 0.0
    %120 = vmatpush1.msra.mxu0 0.0
    %121 = vmatprep.subr.mxu0 0.0
    %122 = vmatpush1.msra.mxu0 0.0
    %123 = vmatprep.subr.mxu0 0.0
    %124 = vmatpush1.msra.mxu0 0.0
    %125 = vmatprep.subr.mxu0 0.0
    %126 = vmatpush1.msra.mxu0 0.0
    %127 = vmatprep.subr.mxu0 0.0
    %128 = vmatpush1.msra.mxu0 0.0
    %129 = vmatprep.mubr.f32.mxu0 0.0
    %130 = vmatmul.mubr.f32.gmra.mrb[0].mxu0 %v63
    %v131 = vpop.f32.mrb[0].mxu0
    %v132 = vadd.f32 %v59, %v131
    %v133 = vpop.f32.mrb[0].mxu0
    %134 = vdwg.mxu0
    %vm135 = vcmask 785408
    %136 = vst.msk [vmem:[#allocation2] sm:$0xff] %vm135, %v132
    %v137 = vld [vmem:[%s4] sm:$0xff]
    %v138 = vld [vmem:[%s4 + $0x8] sm:$0xff]
    %v139 = vld [vmem:[%s4 + $0x10] sm:$0xff]
    %v140 = vld [vmem:[%s4 + $0x18] sm:$0xff]
    %v141 = vld [vmem:[%s5] sm:$0x1]
    %v143 = vlaneseq
    %v144 = vshrl.u32 %v143, 7
    %v145 = vsub.s32 0, %v144
    %v146 = vrot.slane %v141, %v145
    %v148 = vld [vmem:[#allocation8] sm:$0xff]
    %v149 = vld [vmem:[#allocation2] sm:$0xff]
    %vm150 = vcmask 261120
    %v152 = vsel %vm150, %v148, 0
    %154 = vmatprep.subr.mxu0 0.0
    %155 = vmatpush1.msra.mxu0 %v137
    %156 = vmatprep.subr.mxu0 0.0
    %157 = vmatpush1.msra.mxu0 %v138
    %158 = vmatprep.subr.mxu0 0.0
    %159 = vmatpush1.msra.mxu0 %v139
    %160 = vmatprep.subr.mxu0 0.0
    %161 = vmatpush1.msra.mxu0 %v140
    %162 = vmatprep.subr.mxu0 0.0
    %163 = vmatpush1.msra.mxu0 0.0
    %164 = vmatprep.subr.mxu0 0.0
    %165 = vmatpush1.msra.mxu0 0.0
    %166 = vmatprep.subr.mxu0 0.0
    %167 = vmatpush1.msra.mxu0 0.0
    %168 = vmatprep.subr.mxu0 0.0
    %169 = vmatpush1.msra.mxu0 0.0
    %170 = vmatprep.subr.mxu0 0.0
    %171 = vmatpush1.msra.mxu0 0.0
    %172 = vmatprep.subr.mxu0 0.0
    %173 = vmatpush1.msra.mxu0 0.0
    %174 = vmatprep.subr.mxu0 0.0
    %175 = vmatpush1.msra.mxu0 0.0
    %176 = vmatprep.subr.mxu0 0.0
    %177 = vmatpush1.msra.mxu0 0.0
    %178 = vmatprep.subr.mxu0 0.0
    %179 = vmatpush1.msra.mxu0 0.0
    %180 = vmatprep.subr.mxu0 0.0
    %181 = vmatpush1.msra.mxu0 0.0
    %182 = vmatprep.subr.mxu0 0.0
    %183 = vmatpush1.msra.mxu0 0.0
    %184 = vmatprep.subr.mxu0 0.0
    %185 = vmatpush1.msra.mxu0 0.0
    %186 = vmatprep.subr.mxu0 0.0
    %187 = vmatpush1.msra.mxu0 0.0
    %188 = vmatprep.subr.mxu0 0.0
    %189 = vmatpush1.msra.mxu0 0.0
    %190 = vmatprep.subr.mxu0 0.0
    %191 = vmatpush1.msra.mxu0 0.0
    %192 = vmatprep.subr.mxu0 0.0
    %193 = vmatpush1.msra.mxu0 0.0
    %194 = vmatprep.subr.mxu0 0.0
    %195 = vmatpush1.msra.mxu0 0.0
    %196 = vmatprep.subr.mxu0 0.0
    %197 = vmatpush1.msra.mxu0 0.0
    %198 = vmatprep.subr.mxu0 0.0
    %199 = vmatpush1.msra.mxu0 0.0
    %200 = vmatprep.subr.mxu0 0.0
    %201 = vmatpush1.msra.mxu0 0.0
    %202 = vmatprep.subr.mxu0 0.0
    %203 = vmatpush1.msra.mxu0 0.0
    %204 = vmatprep.subr.mxu0 0.0
    %205 = vmatpush1.msra.mxu0 0.0
    %206 = vmatprep.subr.mxu0 0.0
    %207 = vmatpush1.msra.mxu0 0.0
    %208 = vmatprep.subr.mxu0 0.0
    %209 = vmatpush1.msra.mxu0 0.0
    %210 = vmatprep.subr.mxu0 0.0
    %211 = vmatpush1.msra.mxu0 0.0
    %212 = vmatprep.subr.mxu0 0.0
    %213 = vmatpush1.msra.mxu0 0.0
    %214 = vmatprep.subr.mxu0 0.0
    %215 = vmatpush1.msra.mxu0 0.0
    %216 = vmatprep.subr.mxu0 0.0
    %217 = vmatpush1.msra.mxu0 0.0
    %218 = vmatprep.mubr.f32.mxu0 0.0
    %219 = vmatmul.mubr.f32.gmra.mrb[0].mxu0 %v152
    %v220 = vpop.f32.mrb[0].mxu0
    %v221 = vadd.f32 %v146, %v220
    %v222 = vpop.f32.mrb[0].mxu0
    %223 = vdwg.mxu0
    %v224 = vadd.f32 %v149, %v221
    %v225 = vxor.u32 %v224, 2147483648
    %v226 = vmul.f32 %v225, 1.442695
    %v227 = vpow.pop %v226
    %v228 = vadd.f32 %v227, 1.0
    %v229 = vrcp.pop %v228
    %v230 = vmul.f32 1.0, %v229
    %232 = vrot.lane.b32.xlu0 %v221, 64
    %v233 = vpop.permute.xlu0 %232
    %v235 = vmul.f32 %v230, %v233
    %237 = vrot.lane.b32.xlu0 %v235, 64
    %v238 = vpop.permute.xlu0 %237
    %v240 = vadd.f32 %v149, %v238
    %v241 = vtanh.pop %v240
    %v242 = vsub.f32 1.0, %v230
    %244 = vrot.lane.b32.xlu0 %v241, 96
    %v245 = vpop.permute.xlu0 %244
    %v247 = vmul.f32 %v242, %v245
    %248 = vrot.lane.b32.xlu0 %v148, 32
    %v249 = vpop.permute.xlu0 %248
    %v251 = vmul.f32 %v230, %v249
    %v252 = vadd.f32 %v247, %v251
    %254 = vrot.lane.b32.xlu0 %v252, 96
    %v255 = vpop.permute.xlu0 %254
    %257 = vst.msk [vmem:[#allocation3] sm:$0xff] %vm150, %v255
    %258 = vst.msk [vmem:[#allocation8] sm:$0xff] %vm150, %v255
    %v259 = vld [vmem:[#allocation3] sm:$0xff]
    %v260 = vld [vmem:[%s6] sm:$0xff]
    %v261 = vld [vmem:[%s6 + $0x8] sm:$0xff]
    %v262 = vld [vmem:[%s6 + $0x10] sm:$0xff]
    %v263 = vld [vmem:[%s6 + $0x18] sm:$0xff]
    %v264 = vld [vmem:[%s7] sm:$0x1]
    %v266 = vlaneseq
    %v267 = vshrl.u32 %v266, 7
    %v268 = vsub.s32 0, %v267
    %v269 = vrot.slane %v264, %v268
    %v272 = vsel %vm150, %v259, 0
    %274 = vmatprep.subr.mxu0 0.0
    %275 = vmatpush1.msra.mxu0 %v260
    %276 = vmatprep.subr.mxu0 0.0
    %277 = vmatpush1.msra.mxu0 %v261
    %278 = vmatprep.subr.mxu0 0.0
    %279 = vmatpush1.msra.mxu0 %v262
    %280 = vmatprep.subr.mxu0 0.0
    %281 = vmatpush1.msra.mxu0 %v263
    %282 = vmatprep.subr.mxu0 0.0
    %283 = vmatpush1.msra.mxu0 0.0
    %284 = vmatprep.subr.mxu0 0.0
    %285 = vmatpush1.msra.mxu0 0.0
    %286 = vmatprep.subr.mxu0 0.0
    %287 = vmatpush1.msra.mxu0 0.0
    %288 = vmatprep.subr.mxu0 0.0
    %289 = vmatpush1.msra.mxu0 0.0
    %290 = vmatprep.subr.mxu0 0.0
    %291 = vmatpush1.msra.mxu0 0.0
    %292 = vmatprep.subr.mxu0 0.0
    %293 = vmatpush1.msra.mxu0 0.0
    %294 = vmatprep.subr.mxu0 0.0
    %295 = vmatpush1.msra.mxu0 0.0
    %296 = vmatprep.subr.mxu0 0.0
    %297 = vmatpush1.msra.mxu0 0.0
    %298 = vmatprep.subr.mxu0 0.0
    %299 = vmatpush1.msra.mxu0 0.0
    %300 = vmatprep.subr.mxu0 0.0
    %301 = vmatpush1.msra.mxu0 0.0
    %302 = vmatprep.subr.mxu0 0.0
    %303 = vmatpush1.msra.mxu0 0.0
    %304 = vmatprep.subr.mxu0 0.0
    %305 = vmatpush1.msra.mxu0 0.0
    %306 = vmatprep.subr.mxu0 0.0
    %307 = vmatpush1.msra.mxu0 0.0
    %308 = vmatprep.subr.mxu0 0.0
    %309 = vmatpush1.msra.mxu0 0.0
    %310 = vmatprep.subr.mxu0 0.0
    %311 = vmatpush1.msra.mxu0 0.0
    %312 = vmatprep.subr.mxu0 0.0
    %313 = vmatpush1.msra.mxu0 0.0
    %314 = vmatprep.subr.mxu0 0.0
    %315 = vmatpush1.msra.mxu0 0.0
    %316 = vmatprep.subr.mxu0 0.0
    %317 = vmatpush1.msra.mxu0 0.0
    %318 = vmatprep.subr.mxu0 0.0
    %319 = vmatpush1.msra.mxu0 0.0
    %320 = vmatprep.subr.mxu0 0.0
    %321 = vmatpush1.msra.mxu0 0.0
    %322 = vmatprep.subr.mxu0 0.0
    %323 = vmatpush1.msra.mxu0 0.0
    %324 = vmatprep.subr.mxu0 0.0
    %325 = vmatpush1.msra.mxu0 0.0
    %326 = vmatprep.subr.mxu0 0.0
    %327 = vmatpush1.msra.mxu0 0.0
    %328 = vmatprep.subr.mxu0 0.0
    %329 = vmatpush1.msra.mxu0 0.0
    %330 = vmatprep.subr.mxu0 0.0
    %331 = vmatpush1.msra.mxu0 0.0
    %332 = vmatprep.subr.mxu0 0.0
    %333 = vmatpush1.msra.mxu0 0.0
    %334 = vmatprep.subr.mxu0 0.0
    %335 = vmatpush1.msra.mxu0 0.0
    %336 = vmatprep.subr.mxu0 0.0
    %337 = vmatpush1.msra.mxu0 0.0
    %338 = vmatprep.mubr.f32.mxu0 0.0
    %339 = vmatmul.mubr.f32.gmra.mrb[0].mxu0 %v272
    %v340 = vpop.f32.mrb[0].mxu0
    %v341 = vadd.f32 %v269, %v340
    %v342 = vpop.f32.mrb[0].mxu0
    %343 = vdwg.mxu0
    %vm344 = vcmask 130048
    %v345 = vsel %vm344, %v341, -inf
    %346 = vmax.xlane.f32.xlu0 %v345
    %v347 = vpop.xlane.xlu0 %346
    %v348 = vsub.f32 %v341, %v347
    %v349 = vmul.f32 %v348, 1.442695
    %v350 = vpow.pop %v349
    %v351 = vsel %vm344, %v350, 0.0
    %352 = vadd.xlane.f32.xlu0 %v351
    %v353 = vpop.xlane.xlu0 %352
    %v354 = vrcp.pop %v353
    %v355 = vmul.f32 %v353, %v354
    %v356 = vsub.f32 2.0, %v355
    %v357 = vmul.f32 %v354, %v356
    %v358 = vmul.f32 %v350, %v357
    %v359 = vsel %vm344, %v358, 0.0
    %360 = vst [vmem:[#allocation7] sm:$0xff] %v359
    // Predicated region
    $region42: #{tpu_custom_call.1} parent=1 // pred_check
      _
    $region43: #{tpu_custom_call.1} parent=1 // pred_check_branch
      %362 = sbr.rel (0) target = $region45
    $region44: #{tpu_custom_call.1} parent=1 // pred_region
      %s364 = ssub.s32 128, 128
      %365 = vsyncadd [#allocation6], %s364
      %s367 = sshll.u32 [#allocation7], 4
      %s368 = int_to_ptr.vmem [resolvable:$true] %s367
      %370 = dma.vmem_to_hbm [thread:$0]  %s368, 128, %s8, [#allocation6]
    $region45: #{tpu_custom_call.1} parent=1 // pred_fallthru
      _
    // Predicated region
    $region46: #{tpu_custom_call.1} parent=1 // pred_check
      _
    $region47: #{tpu_custom_call.1} parent=1 // pred_check_branch
      %372 = sbr.rel (0) target = $region49
    $region48: #{tpu_custom_call.1} parent=1 // pred_region
      %s374 = ssub.s32 128, 128
      %375 = vsyncadd [#allocation9], %s374
      %s377 = sshll.u32 [#allocation8], 4
      %s378 = int_to_ptr.vmem [resolvable:$true] %s377
      %380 = dma.vmem_to_hbm [thread:$0]  %s378, 128, %s9, [#allocation9]
    $region49: #{tpu_custom_call.1} parent=1 // pred_fallthru
      _
    // Predicated region
    $region50: #{tpu_custom_call.1} parent=1 // pred_check
      _
    $region51: #{tpu_custom_call.1} parent=1 // pred_check_branch
      %382 = sbr.rel (0) target = $region53
    $region52: #{tpu_custom_call.1} parent=1 // pred_region
      %383 = dma.done [#allocation6], 128
    $region53: #{tpu_custom_call.1} parent=1 // pred_fallthru
      _
    // Predicated region
    $region54: #{tpu_custom_call.1} parent=1 // pred_check
      _
    $region55: #{tpu_custom_call.1} parent=1 // pred_check_branch
      %385 = sbr.rel (0) target = $region57
    $region56: #{tpu_custom_call.1} parent=1 // pred_region
      %386 = dma.done [#allocation9], 128
    $region57: #{tpu_custom_call.1} parent=1 // pred_fallthru
      _
    %387 = vsyncpa [#allocation5], 1
    %388 = vsyncpa [#allocation6], 1
    %389 = vsyncpa [#allocation9], 1

</llo_original>
